<compile_context>
chip_gen: v5e
topology: v5e:2x2
jax: 0.10.0
libtpu: 0.0.40
codegen_flags: <defaults>
</compile_context>

<pallas_src>
import jax
import jax.numpy as jnp
import numpy as np
from jax.experimental import pallas as pl
from jax.experimental.pallas import tpu as pltpu

ZERO_VALS = -1000000.0
_CITYSCAPES_TRAIN_ID_TO_EVAL_ID = [7, 8, 11, 12, 13, 17, 19, 20, 21, 22, 23,
                                   24, 25, 26, 27, 28, 31, 32, 33]
_EVAL_TO_TRAIN = {e: t for t, e in enumerate(_CITYSCAPES_TRAIN_ID_TO_EVAL_ID)}
NUM_TRAIN = len(_CITYSCAPES_TRAIN_ID_TO_EVAL_ID)   # 19
NUM_EVAL = 34

# Per-grid-step payload target (input block + output block bytes).  ~12 MiB
# double-buffers to ~24 MiB of VMEM, past the measured ~85% HBM-roofline knee
# on v6e and large enough that the ~0.35 us per-step overhead is a small
# fraction of the per-step DMA time even on v7x's 3.2 TB/s HBM.
_PER_STEP_PAYLOAD_BYTES = 12 * 1024 * 1024
# Explicit scoped-VMEM limit: fits v7x's 64 MiB physical VMEM with headroom,
# and overrides v5e's 16 MiB default so the tile choice above is legal there.
_VMEM_LIMIT_BYTES = 48 * 1024 * 1024


# ----------------------------------------------------------------------------
# Kernel: static 19 -> 34 channel scatter on one (h_tile, W) spatial slab.
# ----------------------------------------------------------------------------
def _scatter_kernel(pred_ref, out_ref):
    # pred_ref: (1, 19, h_tile, W) VMEM;  out_ref: (1, 34, h_tile, W) VMEM.
    # Valid eval channels are dense slab copies, invalid channels are splat
    # fills (broadcast hoisted once).  Pure VPU/vst work with huge slack;
    # the kernel is HBM-bandwidth bound.
    fill = jnp.full(out_ref.shape[2:], ZERO_VALS, dtype=out_ref.dtype)
    for eval_id in range(NUM_EVAL):
        train_id = _EVAL_TO_TRAIN.get(eval_id)
        if train_id is None:
            out_ref[0, eval_id, :, :] = fill
        else:
            out_ref[0, eval_id, :, :] = pred_ref[0, train_id, :, :]


# ----------------------------------------------------------------------------
# Tiling helpers.
# ----------------------------------------------------------------------------
def _sublane_align(dtype):
    # Sub-32-bit dtypes pack along sublanes (bf16 vreg is [16,128], int8/fp8
    # [32,128]); align row tiles to the packing factor to avoid partially
    # packed tiles / relayouts.
    return 8 * max(1, 4 // jnp.dtype(dtype).itemsize)


def _pick_h_tile(h, w, dtype):
    """Largest aligned row-tile keeping (in + out) block near the payload target."""
    itemsize = jnp.dtype(dtype).itemsize
    align = _sublane_align(dtype)
    per_row = (NUM_TRAIN + NUM_EVAL) * w * itemsize
    if h * per_row <= _PER_STEP_PAYLOAD_BYTES:
        return h                      # whole spatial extent in one step
    rows = max(align, (_PER_STEP_PAYLOAD_BYTES // per_row) // align * align)
    rows = min(rows, h)
    if h % rows == 0:
        return rows
    # Prefer an exact divisor of H, but never shrink below half the target:
    # one ragged trailing block is far cheaper than multiplying the per-step
    # overhead across the whole grid.
    for cand in range(rows, max(rows // 2, align) - 1, -align):
        if h % cand == 0:
            return cand
    return rows                        # ragged trailing tile via pl.cdiv


# ----------------------------------------------------------------------------
# pallas_call wrapper.
# ----------------------------------------------------------------------------
def _converter_scatter(prediction, h_tile=None):
    b, _, h, w = prediction.shape
    dtype = prediction.dtype
    if h_tile is None:
        h_tile = _pick_h_tile(h, w, dtype)
    n_h = pl.cdiv(h, h_tile)
    itemsize = jnp.dtype(dtype).itemsize
    bytes_accessed = (NUM_TRAIN + NUM_EVAL) * b * h * w * itemsize
    return pl.pallas_call(
        _scatter_kernel,
        out_shape=jax.ShapeDtypeStruct((b, NUM_EVAL, h, w), dtype),
        grid=(b, n_h),
        in_specs=[pl.BlockSpec((1, NUM_TRAIN, h_tile, w),
                               lambda bi, hi: (bi, 0, hi, 0))],
        out_specs=pl.BlockSpec((1, NUM_EVAL, h_tile, w),
                               lambda bi, hi: (bi, 0, hi, 0)),
        compiler_params=pltpu.CompilerParams(
            # Distinct output blocks on both axes (no accumulators): safe to
            # shard across v7x's two TensorCores.
            dimension_semantics=("parallel", "parallel"),
            vmem_limit_bytes=_VMEM_LIMIT_BYTES,
        ),
        cost_estimate=pl.CostEstimate(
            flops=0, transcendentals=0, bytes_accessed=bytes_accessed),
    )(prediction)


def converter_forward(prediction, h_tile=None):
    """prediction: (B, 19, H, W) -> (B, 34, H, W): -1e6 fill + channel scatter."""
    b, c_in, h, w = prediction.shape
    assert c_in == NUM_TRAIN
    # Lane-density canonicalization: when W is not a multiple of 128 the
    # per-channel slab stores would be lane-masked (e.g. 16/128 useful lanes
    # for W=16).  If the flattened spatial extent is 128-divisible, fold it
    # into a lane-dense (H*W//128, 128) view (channels stay contiguous).
    if w % 128 != 0 and (h * w) % 128 == 0 and h * w >= 128:
        pred = prediction.reshape(b, NUM_TRAIN, (h * w) // 128, 128)
        out = _converter_scatter(pred, h_tile=h_tile)
        return out.reshape(b, NUM_EVAL, h, w)
    return _converter_scatter(prediction, h_tile=h_tile)


# ----------------------------------------------------------------------------
# Pure-JAX reference.
# ----------------------------------------------------------------------------
def converter_reference(prediction):
    b, _, h, w = prediction.shape
    eval_preds = jnp.full((b, NUM_EVAL, h, w), ZERO_VALS, dtype=prediction.dtype)
    return eval_preds.at[:, jnp.asarray(_CITYSCAPES_TRAIN_ID_TO_EVAL_ID)].set(
        prediction)


if __name__ == "__main__":
    key = jax.random.PRNGKey(0)

    def _check(pred, **kw):
        out = jax.block_until_ready(converter_forward(pred, **kw))
        np.testing.assert_allclose(np.asarray(out),
                                   np.asarray(converter_reference(pred)),
                                   rtol=0, atol=0)

    # 1) Small spatial, W not lane-dense -> exercises the (H*W//128, 128) fold.
    _check(jax.random.normal(key, (2, NUM_TRAIN, 16, 16), dtype=jnp.float32))

    # 2) Lane-dense W, whole spatial extent in a single tile per batch.
    _check(jax.random.normal(key, (1, NUM_TRAIN, 64, 256), dtype=jnp.float32))

    # 3) Ragged trailing h-tile (H % h_tile != 0) via explicit override.
    _check(jax.random.normal(key, (1, NUM_TRAIN, 24, 128), dtype=jnp.float32),
           h_tile=16)

    # 4) Odd spatial extent that cannot be lane-folded (falls back to
    #    full-extent (H, W) blocks; correct but lane-masked stores).
    _check(jax.random.normal(key, (2, NUM_TRAIN, 5, 24), dtype=jnp.float32))

    # 5) bf16: fill value and scatter agree with the same-dtype reference.
    _check(jax.random.normal(key, (1, NUM_TRAIN, 16, 128), dtype=jnp.bfloat16))

    print("KERNEL_OK")
</pallas_src>

<mosaic_0001>
module attributes {stable_mosaic.version = 11 : i64} {
  func.func @_scatter_kernel(%arg0: i32, %arg1: i32, %arg2: memref<1x19x2x128xf32, #tpu.memory_space<vmem>>, %arg3: memref<1x34x2x128xf32, #tpu.memory_space<vmem>>) attributes {dimension_semantics = [#tpu.dimension_semantics<parallel>, #tpu.dimension_semantics<parallel>], iteration_bounds = array<i64: 2, 1>, scalar_prefetch = 0 : i64, scratch_operands = 0 : i64, tpu.core_type = #tpu.core_type<tc>, window_params = [{transform_indices = @transform_0, window_bounds = array<i64: 1, 19, 2, 128>}, {transform_indices = @transform_1, window_bounds = array<i64: 1, 34, 2, 128>}]} {
    %cst = arith.constant -1.000000e+06 : f32
    %0 = vector.broadcast %cst : f32 to vector<2x128xf32>
    %c0 = arith.constant 0 : index
    %c0_0 = arith.constant 0 : index
    %c0_1 = arith.constant 0 : index
    %c0_2 = arith.constant 0 : index
    %1 = vector.load %arg3[%c0, %c0_0, %c0_1, %c0_2] : memref<1x34x2x128xf32, #tpu.memory_space<vmem>>, vector<1x1x2x128xf32>
    %2 = vector.shape_cast %1 : vector<1x1x2x128xf32> to vector<2x128xf32>
    %3 = vector.shape_cast %0 : vector<2x128xf32> to vector<1x1x2x128xf32>
    tpu.vector_store %arg3[%c0, %c0_0, %c0_1, %c0_2], %3 {strides = array<i32>} : memref<1x34x2x128xf32, #tpu.memory_space<vmem>>, vector<1x1x2x128xf32>,
    %c0_3 = arith.constant 0 : index
    %c1 = arith.constant 1 : index
    %c0_4 = arith.constant 0 : index
    %c0_5 = arith.constant 0 : index
    %4 = vector.load %arg3[%c0_3, %c1, %c0_4, %c0_5] : memref<1x34x2x128xf32, #tpu.memory_space<vmem>>, vector<1x1x2x128xf32>
    %5 = vector.shape_cast %4 : vector<1x1x2x128xf32> to vector<2x128xf32>
    %6 = vector.shape_cast %0 : vector<2x128xf32> to vector<1x1x2x128xf32>
    tpu.vector_store %arg3[%c0_3, %c1, %c0_4, %c0_5], %6 {strides = array<i32>} : memref<1x34x2x128xf32, #tpu.memory_space<vmem>>, vector<1x1x2x128xf32>,
    %c0_6 = arith.constant 0 : index
    %c2 = arith.constant 2 : index
    %c0_7 = arith.constant 0 : index
    %c0_8 = arith.constant 0 : index
    %7 = vector.load %arg3[%c0_6, %c2, %c0_7, %c0_8] : memref<1x34x2x128xf32, #tpu.memory_space<vmem>>, vector<1x1x2x128xf32>
    %8 = vector.shape_cast %7 : vector<1x1x2x128xf32> to vector<2x128xf32>
    %9 = vector.shape_cast %0 : vector<2x128xf32> to vector<1x1x2x128xf32>
    tpu.vector_store %arg3[%c0_6, %c2, %c0_7, %c0_8], %9 {strides = array<i32>} : memref<1x34x2x128xf32, #tpu.memory_space<vmem>>, vector<1x1x2x128xf32>,
    %c0_9 = arith.constant 0 : index
    %c3 = arith.constant 3 : index
    %c0_10 = arith.constant 0 : index
    %c0_11 = arith.constant 0 : index
    %10 = vector.load %arg3[%c0_9, %c3, %c0_10, %c0_11] : memref<1x34x2x128xf32, #tpu.memory_space<vmem>>, vector<1x1x2x128xf32>
    %11 = vector.shape_cast %10 : vector<1x1x2x128xf32> to vector<2x128xf32>
    %12 = vector.shape_cast %0 : vector<2x128xf32> to vector<1x1x2x128xf32>
    tpu.vector_store %arg3[%c0_9, %c3, %c0_10, %c0_11], %12 {strides = array<i32>} : memref<1x34x2x128xf32, #tpu.memory_space<vmem>>, vector<1x1x2x128xf32>,
    %c0_12 = arith.constant 0 : index
    %c4 = arith.constant 4 : index
    %c0_13 = arith.constant 0 : index
    %c0_14 = arith.constant 0 : index
    %13 = vector.load %arg3[%c0_12, %c4, %c0_13, %c0_14] : memref<1x34x2x128xf32, #tpu.memory_space<vmem>>, vector<1x1x2x128xf32>
    %14 = vector.shape_cast %13 : vector<1x1x2x128xf32> to vector<2x128xf32>
    %15 = vector.shape_cast %0 : vector<2x128xf32> to vector<1x1x2x128xf32>
    tpu.vector_store %arg3[%c0_12, %c4, %c0_13, %c0_14], %15 {strides = array<i32>} : memref<1x34x2x128xf32, #tpu.memory_space<vmem>>, vector<1x1x2x128xf32>,
    %c0_15 = arith.constant 0 : index
    %c5 = arith.constant 5 : index
    %c0_16 = arith.constant 0 : index
    %c0_17 = arith.constant 0 : index
    %16 = vector.load %arg3[%c0_15, %c5, %c0_16, %c0_17] : memref<1x34x2x128xf32, #tpu.memory_space<vmem>>, vector<1x1x2x128xf32>
    %17 = vector.shape_cast %16 : vector<1x1x2x128xf32> to vector<2x128xf32>
    %18 = vector.shape_cast %0 : vector<2x128xf32> to vector<1x1x2x128xf32>
    tpu.vector_store %arg3[%c0_15, %c5, %c0_16, %c0_17], %18 {strides = array<i32>} : memref<1x34x2x128xf32, #tpu.memory_space<vmem>>, vector<1x1x2x128xf32>,
    %c0_18 = arith.constant 0 : index
    %c6 = arith.constant 6 : index
    %c0_19 = arith.constant 0 : index
    %c0_20 = arith.constant 0 : index
    %19 = vector.load %arg3[%c0_18, %c6, %c0_19, %c0_20] : memref<1x34x2x128xf32, #tpu.memory_space<vmem>>, vector<1x1x2x128xf32>
    %20 = vector.shape_cast %19 : vector<1x1x2x128xf32> to vector<2x128xf32>
    %21 = vector.shape_cast %0 : vector<2x128xf32> to vector<1x1x2x128xf32>
    tpu.vector_store %arg3[%c0_18, %c6, %c0_19, %c0_20], %21 {strides = array<i32>} : memref<1x34x2x128xf32, #tpu.memory_space<vmem>>, vector<1x1x2x128xf32>,
    %c0_21 = arith.constant 0 : index
    %c0_22 = arith.constant 0 : index
    %c0_23 = arith.constant 0 : index
    %c0_24 = arith.constant 0 : index
    %22 = vector.load %arg2[%c0_21, %c0_22, %c0_23, %c0_24] : memref<1x19x2x128xf32, #tpu.memory_space<vmem>>, vector<1x1x2x128xf32>
    %23 = vector.shape_cast %22 : vector<1x1x2x128xf32> to vector<2x128xf32>
    %c0_25 = arith.constant 0 : index
    %c7 = arith.constant 7 : index
    %c0_26 = arith.constant 0 : index
    %c0_27 = arith.constant 0 : index
    %24 = vector.load %arg3[%c0_25, %c7, %c0_26, %c0_27] : memref<1x34x2x128xf32, #tpu.memory_space<vmem>>, vector<1x1x2x128xf32>
    %25 = vector.shape_cast %24 : vector<1x1x2x128xf32> to vector<2x128xf32>
    %26 = vector.shape_cast %23 : vector<2x128xf32> to vector<1x1x2x128xf32>
    tpu.vector_store %arg3[%c0_25, %c7, %c0_26, %c0_27], %26 {strides = array<i32>} : memref<1x34x2x128xf32, #tpu.memory_space<vmem>>, vector<1x1x2x128xf32>,
    %c0_28 = arith.constant 0 : index
    %c1_29 = arith.constant 1 : index
    %c0_30 = arith.constant 0 : index
    %c0_31 = arith.constant 0 : index
    %27 = vector.load %arg2[%c0_28, %c1_29, %c0_30, %c0_31] : memref<1x19x2x128xf32, #tpu.memory_space<vmem>>, vector<1x1x2x128xf32>
    %28 = vector.shape_cast %27 : vector<1x1x2x128xf32> to vector<2x128xf32>
    %c0_32 = arith.constant 0 : index
    %c8 = arith.constant 8 : index
    %c0_33 = arith.constant 0 : index
    %c0_34 = arith.constant 0 : index
    %29 = vector.load %arg3[%c0_32, %c8, %c0_33, %c0_34] : memref<1x34x2x128xf32, #tpu.memory_space<vmem>>, vector<1x1x2x128xf32>
    %30 = vector.shape_cast %29 : vector<1x1x2x128xf32> to vector<2x128xf32>
    %31 = vector.shape_cast %28 : vector<2x128xf32> to vector<1x1x2x128xf32>
    tpu.vector_store %arg3[%c0_32, %c8, %c0_33, %c0_34], %31 {strides = array<i32>} : memref<1x34x2x128xf32, #tpu.memory_space<vmem>>, vector<1x1x2x128xf32>,
    %c0_35 = arith.constant 0 : index
    %c9 = arith.constant 9 : index
    %c0_36 = arith.constant 0 : index
    %c0_37 = arith.constant 0 : index
    %32 = vector.load %arg3[%c0_35, %c9, %c0_36, %c0_37] : memref<1x34x2x128xf32, #tpu.memory_space<vmem>>, vector<1x1x2x128xf32>
    %33 = vector.shape_cast %32 : vector<1x1x2x128xf32> to vector<2x128xf32>
    %34 = vector.shape_cast %0 : vector<2x128xf32> to vector<1x1x2x128xf32>
    tpu.vector_store %arg3[%c0_35, %c9, %c0_36, %c0_37], %34 {strides = array<i32>} : memref<1x34x2x128xf32, #tpu.memory_space<vmem>>, vector<1x1x2x128xf32>,
    %c0_38 = arith.constant 0 : index
    %c10 = arith.constant 10 : index
    %c0_39 = arith.constant 0 : index
    %c0_40 = arith.constant 0 : index
    %35 = vector.load %arg3[%c0_38, %c10, %c0_39, %c0_40] : memref<1x34x2x128xf32, #tpu.memory_space<vmem>>, vector<1x1x2x128xf32>
    %36 = vector.shape_cast %35 : vector<1x1x2x128xf32> to vector<2x128xf32>
    %37 = vector.shape_cast %0 : vector<2x128xf32> to vector<1x1x2x128xf32>
    tpu.vector_store %arg3[%c0_38, %c10, %c0_39, %c0_40], %37 {strides = array<i32>} : memref<1x34x2x128xf32, #tpu.memory_space<vmem>>, vector<1x1x2x128xf32>,
    %c0_41 = arith.constant 0 : index
    %c2_42 = arith.constant 2 : index
    %c0_43 = arith.constant 0 : index
    %c0_44 = arith.constant 0 : index
    %38 = vector.load %arg2[%c0_41, %c2_42, %c0_43, %c0_44] : memref<1x19x2x128xf32, #tpu.memory_space<vmem>>, vector<1x1x2x128xf32>
    %39 = vector.shape_cast %38 : vector<1x1x2x128xf32> to vector<2x128xf32>
    %c0_45 = arith.constant 0 : index
    %c11 = arith.constant 11 : index
    %c0_46 = arith.constant 0 : index
    %c0_47 = arith.constant 0 : index
    %40 = vector.load %arg3[%c0_45, %c11, %c0_46, %c0_47] : memref<1x34x2x128xf32, #tpu.memory_space<vmem>>, vector<1x1x2x128xf32>
    %41 = vector.shape_cast %40 : vector<1x1x2x128xf32> to vector<2x128xf32>
    %42 = vector.shape_cast %39 : vector<2x128xf32> to vector<1x1x2x128xf32>
    tpu.vector_store %arg3[%c0_45, %c11, %c0_46, %c0_47], %42 {strides = array<i32>} : memref<1x34x2x128xf32, #tpu.memory_space<vmem>>, vector<1x1x2x128xf32>,
    %c0_48 = arith.constant 0 : index
    %c3_49 = arith.constant 3 : index
    %c0_50 = arith.constant 0 : index
    %c0_51 = arith.constant 0 : index
    %43 = vector.load %arg2[%c0_48, %c3_49, %c0_50, %c0_51] : memref<1x19x2x128xf32, #tpu.memory_space<vmem>>, vector<1x1x2x128xf32>
    %44 = vector.shape_cast %43 : vector<1x1x2x128xf32> to vector<2x128xf32>
    %c0_52 = arith.constant 0 : index
    %c12 = arith.constant 12 : index
    %c0_53 = arith.constant 0 : index
    %c0_54 = arith.constant 0 : index
    %45 = vector.load %arg3[%c0_52, %c12, %c0_53, %c0_54] : memref<1x34x2x128xf32, #tpu.memory_space<vmem>>, vector<1x1x2x128xf32>
    %46 = vector.shape_cast %45 : vector<1x1x2x128xf32> to vector<2x128xf32>
    %47 = vector.shape_cast %44 : vector<2x128xf32> to vector<1x1x2x128xf32>
    tpu.vector_store %arg3[%c0_52, %c12, %c0_53, %c0_54], %47 {strides = array<i32>} : memref<1x34x2x128xf32, #tpu.memory_space<vmem>>, vector<1x1x2x128xf32>,
    %c0_55 = arith.constant 0 : index
    %c4_56 = arith.constant 4 : index
    %c0_57 = arith.constant 0 : index
    %c0_58 = arith.constant 0 : index
    %48 = vector.load %arg2[%c0_55, %c4_56, %c0_57, %c0_58] : memref<1x19x2x128xf32, #tpu.memory_space<vmem>>, vector<1x1x2x128xf32>
    %49 = vector.shape_cast %48 : vector<1x1x2x128xf32> to vector<2x128xf32>
    %c0_59 = arith.constant 0 : index
    %c13 = arith.constant 13 : index
    %c0_60 = arith.constant 0 : index
    %c0_61 = arith.constant 0 : index
    %50 = vector.load %arg3[%c0_59, %c13, %c0_60, %c0_61] : memref<1x34x2x128xf32, #tpu.memory_space<vmem>>, vector<1x1x2x128xf32>
    %51 = vector.shape_cast %50 : vector<1x1x2x128xf32> to vector<2x128xf32>
    %52 = vector.shape_cast %49 : vector<2x128xf32> to vector<1x1x2x128xf32>
    tpu.vector_store %arg3[%c0_59, %c13, %c0_60, %c0_61], %52 {strides = array<i32>} : memref<1x34x2x128xf32, #tpu.memory_space<vmem>>, vector<1x1x2x128xf32>,
    %c0_62 = arith.constant 0 : index
    %c14 = arith.constant 14 : index
    %c0_63 = arith.constant 0 : index
    %c0_64 = arith.constant 0 : index
    %53 = vector.load %arg3[%c0_62, %c14, %c0_63, %c0_64] : memref<1x34x2x128xf32, #tpu.memory_space<vmem>>, vector<1x1x2x128xf32>
    %54 = vector.shape_cast %53 : vector<1x1x2x128xf32> to vector<2x128xf32>
    %55 = vector.shape_cast %0 : vector<2x128xf32> to vector<1x1x2x128xf32>
    tpu.vector_store %arg3[%c0_62, %c14, %c0_63, %c0_64], %55 {strides = array<i32>} : memref<1x34x2x128xf32, #tpu.memory_space<vmem>>, vector<1x1x2x128xf32>,
    %c0_65 = arith.constant 0 : index
    %c15 = arith.constant 15 : index
    %c0_66 = arith.constant 0 : index
    %c0_67 = arith.constant 0 : index
    %56 = vector.load %arg3[%c0_65, %c15, %c0_66, %c0_67] : memref<1x34x2x128xf32, #tpu.memory_space<vmem>>, vector<1x1x2x128xf32>
    %57 = vector.shape_cast %56 : vector<1x1x2x128xf32> to vector<2x128xf32>
    %58 = vector.shape_cast %0 : vector<2x128xf32> to vector<1x1x2x128xf32>
    tpu.vector_store %arg3[%c0_65, %c15, %c0_66, %c0_67], %58 {strides = array<i32>} : memref<1x34x2x128xf32, #tpu.memory_space<vmem>>, vector<1x1x2x128xf32>,
    %c0_68 = arith.constant 0 : index
    %c16 = arith.constant 16 : index
    %c0_69 = arith.constant 0 : index
    %c0_70 = arith.constant 0 : index
    %59 = vector.load %arg3[%c0_68, %c16, %c0_69, %c0_70] : memref<1x34x2x128xf32, #tpu.memory_space<vmem>>, vector<1x1x2x128xf32>
    %60 = vector.shape_cast %59 : vector<1x1x2x128xf32> to vector<2x128xf32>
    %61 = vector.shape_cast %0 : vector<2x128xf32> to vector<1x1x2x128xf32>
    tpu.vector_store %arg3[%c0_68, %c16, %c0_69, %c0_70], %61 {strides = array<i32>} : memref<1x34x2x128xf32, #tpu.memory_space<vmem>>, vector<1x1x2x128xf32>,
    %c0_71 = arith.constant 0 : index
    %c5_72 = arith.constant 5 : index
    %c0_73 = arith.constant 0 : index
    %c0_74 = arith.constant 0 : index
    %62 = vector.load %arg2[%c0_71, %c5_72, %c0_73, %c0_74] : memref<1x19x2x128xf32, #tpu.memory_space<vmem>>, vector<1x1x2x128xf32>
    %63 = vector.shape_cast %62 : vector<1x1x2x128xf32> to vector<2x128xf32>
    %c0_75 = arith.constant 0 : index
    %c17 = arith.constant 17 : index
    %c0_76 = arith.constant 0 : index
    %c0_77 = arith.constant 0 : index
    %64 = vector.load %arg3[%c0_75, %c17, %c0_76, %c0_77] : memref<1x34x2x128xf32, #tpu.memory_space<vmem>>, vector<1x1x2x128xf32>
    %65 = vector.shape_cast %64 : vector<1x1x2x128xf32> to vector<2x128xf32>
    %66 = vector.shape_cast %63 : vector<2x128xf32> to vector<1x1x2x128xf32>
    tpu.vector_store %arg3[%c0_75, %c17, %c0_76, %c0_77], %66 {strides = array<i32>} : memref<1x34x2x128xf32, #tpu.memory_space<vmem>>, vector<1x1x2x128xf32>,
    %c0_78 = arith.constant 0 : index
    %c18 = arith.constant 18 : index
    %c0_79 = arith.constant 0 : index
    %c0_80 = arith.constant 0 : index
    %67 = vector.load %arg3[%c0_78, %c18, %c0_79, %c0_80] : memref<1x34x2x128xf32, #tpu.memory_space<vmem>>, vector<1x1x2x128xf32>
    %68 = vector.shape_cast %67 : vector<1x1x2x128xf32> to vector<2x128xf32>
    %69 = vector.shape_cast %0 : vector<2x128xf32> to vector<1x1x2x128xf32>
    tpu.vector_store %arg3[%c0_78, %c18, %c0_79, %c0_80], %69 {strides = array<i32>} : memref<1x34x2x128xf32, #tpu.memory_space<vmem>>, vector<1x1x2x128xf32>,
    %c0_81 = arith.constant 0 : index
    %c6_82 = arith.constant 6 : index
    %c0_83 = arith.constant 0 : index
    %c0_84 = arith.constant 0 : index
    %70 = vector.load %arg2[%c0_81, %c6_82, %c0_83, %c0_84] : memref<1x19x2x128xf32, #tpu.memory_space<vmem>>, vector<1x1x2x128xf32>
    %71 = vector.shape_cast %70 : vector<1x1x2x128xf32> to vector<2x128xf32>
    %c0_85 = arith.constant 0 : index
    %c19 = arith.constant 19 : index
    %c0_86 = arith.constant 0 : index
    %c0_87 = arith.constant 0 : index
    %72 = vector.load %arg3[%c0_85, %c19, %c0_86, %c0_87] : memref<1x34x2x128xf32, #tpu.memory_space<vmem>>, vector<1x1x2x128xf32>
    %73 = vector.shape_cast %72 : vector<1x1x2x128xf32> to vector<2x128xf32>
    %74 = vector.shape_cast %71 : vector<2x128xf32> to vector<1x1x2x128xf32>
    tpu.vector_store %arg3[%c0_85, %c19, %c0_86, %c0_87], %74 {strides = array<i32>} : memref<1x34x2x128xf32, #tpu.memory_space<vmem>>, vector<1x1x2x128xf32>,
    %c0_88 = arith.constant 0 : index
    %c7_89 = arith.constant 7 : index
    %c0_90 = arith.constant 0 : index
    %c0_91 = arith.constant 0 : index
    %75 = vector.load %arg2[%c0_88, %c7_89, %c0_90, %c0_91] : memref<1x19x2x128xf32, #tpu.memory_space<vmem>>, vector<1x1x2x128xf32>
    %76 = vector.shape_cast %75 : vector<1x1x2x128xf32> to vector<2x128xf32>
    %c0_92 = arith.constant 0 : index
    %c20 = arith.constant 20 : index
    %c0_93 = arith.constant 0 : index
    %c0_94 = arith.constant 0 : index
    %77 = vector.load %arg3[%c0_92, %c20, %c0_93, %c0_94] : memref<1x34x2x128xf32, #tpu.memory_space<vmem>>, vector<1x1x2x128xf32>
    %78 = vector.shape_cast %77 : vector<1x1x2x128xf32> to vector<2x128xf32>
    %79 = vector.shape_cast %76 : vector<2x128xf32> to vector<1x1x2x128xf32>
    tpu.vector_store %arg3[%c0_92, %c20, %c0_93, %c0_94], %79 {strides = array<i32>} : memref<1x34x2x128xf32, #tpu.memory_space<vmem>>, vector<1x1x2x128xf32>,
    %c0_95 = arith.constant 0 : index
    %c8_96 = arith.constant 8 : index
    %c0_97 = arith.constant 0 : index
    %c0_98 = arith.constant 0 : index
    %80 = vector.load %arg2[%c0_95, %c8_96, %c0_97, %c0_98] : memref<1x19x2x128xf32, #tpu.memory_space<vmem>>, vector<1x1x2x128xf32>
    %81 = vector.shape_cast %80 : vector<1x1x2x128xf32> to vector<2x128xf32>
    %c0_99 = arith.constant 0 : index
    %c21 = arith.constant 21 : index
    %c0_100 = arith.constant 0 : index
    %c0_101 = arith.constant 0 : index
    %82 = vector.load %arg3[%c0_99, %c21, %c0_100, %c0_101] : memref<1x34x2x128xf32, #tpu.memory_space<vmem>>, vector<1x1x2x128xf32>
    %83 = vector.shape_cast %82 : vector<1x1x2x128xf32> to vector<2x128xf32>
    %84 = vector.shape_cast %81 : vector<2x128xf32> to vector<1x1x2x128xf32>
    tpu.vector_store %arg3[%c0_99, %c21, %c0_100, %c0_101], %84 {strides = array<i32>} : memref<1x34x2x128xf32, #tpu.memory_space<vmem>>, vector<1x1x2x128xf32>,
    %c0_102 = arith.constant 0 : index
    %c9_103 = arith.constant 9 : index
    %c0_104 = arith.constant 0 : index
    %c0_105 = arith.constant 0 : index
    %85 = vector.load %arg2[%c0_102, %c9_103, %c0_104, %c0_105] : memref<1x19x2x128xf32, #tpu.memory_space<vmem>>, vector<1x1x2x128xf32>
    %86 = vector.shape_cast %85 : vector<1x1x2x128xf32> to vector<2x128xf32>
    %c0_106 = arith.constant 0 : index
    %c22 = arith.constant 22 : index
    %c0_107 = arith.constant 0 : index
    %c0_108 = arith.constant 0 : index
    %87 = vector.load %arg3[%c0_106, %c22, %c0_107, %c0_108] : memref<1x34x2x128xf32, #tpu.memory_space<vmem>>, vector<1x1x2x128xf32>
    %88 = vector.shape_cast %87 : vector<1x1x2x128xf32> to vector<2x128xf32>
    %89 = vector.shape_cast %86 : vector<2x128xf32> to vector<1x1x2x128xf32>
    tpu.vector_store %arg3[%c0_106, %c22, %c0_107, %c0_108], %89 {strides = array<i32>} : memref<1x34x2x128xf32, #tpu.memory_space<vmem>>, vector<1x1x2x128xf32>,
    %c0_109 = arith.constant 0 : index
    %c10_110 = arith.constant 10 : index
    %c0_111 = arith.constant 0 : index
    %c0_112 = arith.constant 0 : index
    %90 = vector.load %arg2[%c0_109, %c10_110, %c0_111, %c0_112] : memref<1x19x2x128xf32, #tpu.memory_space<vmem>>, vector<1x1x2x128xf32>
    %91 = vector.shape_cast %90 : vector<1x1x2x128xf32> to vector<2x128xf32>
    %c0_113 = arith.constant 0 : index
    %c23 = arith.constant 23 : index
    %c0_114 = arith.constant 0 : index
    %c0_115 = arith.constant 0 : index
    %92 = vector.load %arg3[%c0_113, %c23, %c0_114, %c0_115] : memref<1x34x2x128xf32, #tpu.memory_space<vmem>>, vector<1x1x2x128xf32>
    %93 = vector.shape_cast %92 : vector<1x1x2x128xf32> to vector<2x128xf32>
    %94 = vector.shape_cast %91 : vector<2x128xf32> to vector<1x1x2x128xf32>
    tpu.vector_store %arg3[%c0_113, %c23, %c0_114, %c0_115], %94 {strides = array<i32>} : memref<1x34x2x128xf32, #tpu.memory_space<vmem>>, vector<1x1x2x128xf32>,
    %c0_116 = arith.constant 0 : index
    %c11_117 = arith.constant 11 : index
    %c0_118 = arith.constant 0 : index
    %c0_119 = arith.constant 0 : index
    %95 = vector.load %arg2[%c0_116, %c11_117, %c0_118, %c0_119] : memref<1x19x2x128xf32, #tpu.memory_space<vmem>>, vector<1x1x2x128xf32>
    %96 = vector.shape_cast %95 : vector<1x1x2x128xf32> to vector<2x128xf32>
    %c0_120 = arith.constant 0 : index
    %c24 = arith.constant 24 : index
    %c0_121 = arith.constant 0 : index
    %c0_122 = arith.constant 0 : index
    %97 = vector.load %arg3[%c0_120, %c24, %c0_121, %c0_122] : memref<1x34x2x128xf32, #tpu.memory_space<vmem>>, vector<1x1x2x128xf32>
    %98 = vector.shape_cast %97 : vector<1x1x2x128xf32> to vector<2x128xf32>
    %99 = vector.shape_cast %96 : vector<2x128xf32> to vector<1x1x2x128xf32>
    tpu.vector_store %arg3[%c0_120, %c24, %c0_121, %c0_122], %99 {strides = array<i32>} : memref<1x34x2x128xf32, #tpu.memory_space<vmem>>, vector<1x1x2x128xf32>,
    %c0_123 = arith.constant 0 : index
    %c12_124 = arith.constant 12 : index
    %c0_125 = arith.constant 0 : index
    %c0_126 = arith.constant 0 : index
    %100 = vector.load %arg2[%c0_123, %c12_124, %c0_125, %c0_126] : memref<1x19x2x128xf32, #tpu.memory_space<vmem>>, vector<1x1x2x128xf32>
    %101 = vector.shape_cast %100 : vector<1x1x2x128xf32> to vector<2x128xf32>
    %c0_127 = arith.constant 0 : index
    %c25 = arith.constant 25 : index
    %c0_128 = arith.constant 0 : index
    %c0_129 = arith.constant 0 : index
    %102 = vector.load %arg3[%c0_127, %c25, %c0_128, %c0_129] : memref<1x34x2x128xf32, #tpu.memory_space<vmem>>, vector<1x1x2x128xf32>
    %103 = vector.shape_cast %102 : vector<1x1x2x128xf32> to vector<2x128xf32>
    %104 = vector.shape_cast %101 : vector<2x128xf32> to vector<1x1x2x128xf32>
    tpu.vector_store %arg3[%c0_127, %c25, %c0_128, %c0_129], %104 {strides = array<i32>} : memref<1x34x2x128xf32, #tpu.memory_space<vmem>>, vector<1x1x2x128xf32>,
    %c0_130 = arith.constant 0 : index
    %c13_131 = arith.constant 13 : index
    %c0_132 = arith.constant 0 : index
    %c0_133 = arith.constant 0 : index
    %105 = vector.load %arg2[%c0_130, %c13_131, %c0_132, %c0_133] : memref<1x19x2x128xf32, #tpu.memory_space<vmem>>, vector<1x1x2x128xf32>
    %106 = vector.shape_cast %105 : vector<1x1x2x128xf32> to vector<2x128xf32>
    %c0_134 = arith.constant 0 : index
    %c26 = arith.constant 26 : index
    %c0_135 = arith.constant 0 : index
    %c0_136 = arith.constant 0 : index
    %107 = vector.load %arg3[%c0_134, %c26, %c0_135, %c0_136] : memref<1x34x2x128xf32, #tpu.memory_space<vmem>>, vector<1x1x2x128xf32>
    %108 = vector.shape_cast %107 : vector<1x1x2x128xf32> to vector<2x128xf32>
    %109 = vector.shape_cast %106 : vector<2x128xf32> to vector<1x1x2x128xf32>
    tpu.vector_store %arg3[%c0_134, %c26, %c0_135, %c0_136], %109 {strides = array<i32>} : memref<1x34x2x128xf32, #tpu.memory_space<vmem>>, vector<1x1x2x128xf32>,
    %c0_137 = arith.constant 0 : index
    %c14_138 = arith.constant 14 : index
    %c0_139 = arith.constant 0 : index
    %c0_140 = arith.constant 0 : index
    %110 = vector.load %arg2[%c0_137, %c14_138, %c0_139, %c0_140] : memref<1x19x2x128xf32, #tpu.memory_space<vmem>>, vector<1x1x2x128xf32>
    %111 = vector.shape_cast %110 : vector<1x1x2x128xf32> to vector<2x128xf32>
    %c0_141 = arith.constant 0 : index
    %c27 = arith.constant 27 : index
    %c0_142 = arith.constant 0 : index
    %c0_143 = arith.constant 0 : index
    %112 = vector.load %arg3[%c0_141, %c27, %c0_142, %c0_143] : memref<1x34x2x128xf32, #tpu.memory_space<vmem>>, vector<1x1x2x128xf32>
    %113 = vector.shape_cast %112 : vector<1x1x2x128xf32> to vector<2x128xf32>
    %114 = vector.shape_cast %111 : vector<2x128xf32> to vector<1x1x2x128xf32>
    tpu.vector_store %arg3[%c0_141, %c27, %c0_142, %c0_143], %114 {strides = array<i32>} : memref<1x34x2x128xf32, #tpu.memory_space<vmem>>, vector<1x1x2x128xf32>,
    %c0_144 = arith.constant 0 : index
    %c15_145 = arith.constant 15 : index
    %c0_146 = arith.constant 0 : index
    %c0_147 = arith.constant 0 : index
    %115 = vector.load %arg2[%c0_144, %c15_145, %c0_146, %c0_147] : memref<1x19x2x128xf32, #tpu.memory_space<vmem>>, vector<1x1x2x128xf32>
    %116 = vector.shape_cast %115 : vector<1x1x2x128xf32> to vector<2x128xf32>
    %c0_148 = arith.constant 0 : index
    %c28 = arith.constant 28 : index
    %c0_149 = arith.constant 0 : index
    %c0_150 = arith.constant 0 : index
    %117 = vector.load %arg3[%c0_148, %c28, %c0_149, %c0_150] : memref<1x34x2x128xf32, #tpu.memory_space<vmem>>, vector<1x1x2x128xf32>
    %118 = vector.shape_cast %117 : vector<1x1x2x128xf32> to vector<2x128xf32>
    %119 = vector.shape_cast %116 : vector<2x128xf32> to vector<1x1x2x128xf32>
    tpu.vector_store %arg3[%c0_148, %c28, %c0_149, %c0_150], %119 {strides = array<i32>} : memref<1x34x2x128xf32, #tpu.memory_space<vmem>>, vector<1x1x2x128xf32>,
    %c0_151 = arith.constant 0 : index
    %c29 = arith.constant 29 : index
    %c0_152 = arith.constant 0 : index
    %c0_153 = arith.constant 0 : index
    %120 = vector.load %arg3[%c0_151, %c29, %c0_152, %c0_153] : memref<1x34x2x128xf32, #tpu.memory_space<vmem>>, vector<1x1x2x128xf32>
    %121 = vector.shape_cast %120 : vector<1x1x2x128xf32> to vector<2x128xf32>
    %122 = vector.shape_cast %0 : vector<2x128xf32> to vector<1x1x2x128xf32>
    tpu.vector_store %arg3[%c0_151, %c29, %c0_152, %c0_153], %122 {strides = array<i32>} : memref<1x34x2x128xf32, #tpu.memory_space<vmem>>, vector<1x1x2x128xf32>,
    %c0_154 = arith.constant 0 : index
    %c30 = arith.constant 30 : index
    %c0_155 = arith.constant 0 : index
    %c0_156 = arith.constant 0 : index
    %123 = vector.load %arg3[%c0_154, %c30, %c0_155, %c0_156] : memref<1x34x2x128xf32, #tpu.memory_space<vmem>>, vector<1x1x2x128xf32>
    %124 = vector.shape_cast %123 : vector<1x1x2x128xf32> to vector<2x128xf32>
    %125 = vector.shape_cast %0 : vector<2x128xf32> to vector<1x1x2x128xf32>
    tpu.vector_store %arg3[%c0_154, %c30, %c0_155, %c0_156], %125 {strides = array<i32>} : memref<1x34x2x128xf32, #tpu.memory_space<vmem>>, vector<1x1x2x128xf32>,
    %c0_157 = arith.constant 0 : index
    %c16_158 = arith.constant 16 : index
    %c0_159 = arith.constant 0 : index
    %c0_160 = arith.constant 0 : index
    %126 = vector.load %arg2[%c0_157, %c16_158, %c0_159, %c0_160] : memref<1x19x2x128xf32, #tpu.memory_space<vmem>>, vector<1x1x2x128xf32>
    %127 = vector.shape_cast %126 : vector<1x1x2x128xf32> to vector<2x128xf32>
    %c0_161 = arith.constant 0 : index
    %c31 = arith.constant 31 : index
    %c0_162 = arith.constant 0 : index
    %c0_163 = arith.constant 0 : index
    %128 = vector.load %arg3[%c0_161, %c31, %c0_162, %c0_163] : memref<1x34x2x128xf32, #tpu.memory_space<vmem>>, vector<1x1x2x128xf32>
    %129 = vector.shape_cast %128 : vector<1x1x2x128xf32> to vector<2x128xf32>
    %130 = vector.shape_cast %127 : vector<2x128xf32> to vector<1x1x2x128xf32>
    tpu.vector_store %arg3[%c0_161, %c31, %c0_162, %c0_163], %130 {strides = array<i32>} : memref<1x34x2x128xf32, #tpu.memory_space<vmem>>, vector<1x1x2x128xf32>,
    %c0_164 = arith.constant 0 : index
    %c17_165 = arith.constant 17 : index
    %c0_166 = arith.constant 0 : index
    %c0_167 = arith.constant 0 : index
    %131 = vector.load %arg2[%c0_164, %c17_165, %c0_166, %c0_167] : memref<1x19x2x128xf32, #tpu.memory_space<vmem>>, vector<1x1x2x128xf32>
    %132 = vector.shape_cast %131 : vector<1x1x2x128xf32> to vector<2x128xf32>
    %c0_168 = arith.constant 0 : index
    %c32 = arith.constant 32 : index
    %c0_169 = arith.constant 0 : index
    %c0_170 = arith.constant 0 : index
    %133 = vector.load %arg3[%c0_168, %c32, %c0_169, %c0_170] : memref<1x34x2x128xf32, #tpu.memory_space<vmem>>, vector<1x1x2x128xf32>
    %134 = vector.shape_cast %133 : vector<1x1x2x128xf32> to vector<2x128xf32>
    %135 = vector.shape_cast %132 : vector<2x128xf32> to vector<1x1x2x128xf32>
    tpu.vector_store %arg3[%c0_168, %c32, %c0_169, %c0_170], %135 {strides = array<i32>} : memref<1x34x2x128xf32, #tpu.memory_space<vmem>>, vector<1x1x2x128xf32>,
    %c0_171 = arith.constant 0 : index
    %c18_172 = arith.constant 18 : index
    %c0_173 = arith.constant 0 : index
    %c0_174 = arith.constant 0 : index
    %136 = vector.load %arg2[%c0_171, %c18_172, %c0_173, %c0_174] : memref<1x19x2x128xf32, #tpu.memory_space<vmem>>, vector<1x1x2x128xf32>
    %137 = vector.shape_cast %136 : vector<1x1x2x128xf32> to vector<2x128xf32>
    %c0_175 = arith.constant 0 : index
    %c33 = arith.constant 33 : index
    %c0_176 = arith.constant 0 : index
    %c0_177 = arith.constant 0 : index
    %138 = vector.load %arg3[%c0_175, %c33, %c0_176, %c0_177] : memref<1x34x2x128xf32, #tpu.memory_space<vmem>>, vector<1x1x2x128xf32>
    %139 = vector.shape_cast %138 : vector<1x1x2x128xf32> to vector<2x128xf32>
    %140 = vector.shape_cast %137 : vector<2x128xf32> to vector<1x1x2x128xf32>
    tpu.vector_store %arg3[%c0_175, %c33, %c0_176, %c0_177], %140 {strides = array<i32>} : memref<1x34x2x128xf32, #tpu.memory_space<vmem>>, vector<1x1x2x128xf32>,
    return
  }
  func.func @transform_0(%arg0: i32, %arg1: i32) -> (i32, i32, i32, i32) {
    %c0_i32 = arith.constant 0 : i32
    %c0_i32_0 = arith.constant 0 : i32
    %c0_i32_1 = arith.constant 0 : i32
    return %arg0, %c0_i32, %arg1, %c0_i32_0 : i32, i32, i32, i32
  }
  func.func @transform_1(%arg0: i32, %arg1: i32) -> (i32, i32, i32, i32) {
    %c0_i32 = arith.constant 0 : i32
    %c0_i32_0 = arith.constant 0 : i32
    %c0_i32_1 = arith.constant 0 : i32
    return %arg0, %c0_i32, %arg1, %c0_i32_0 : i32, i32, i32, i32
  }
}

</mosaic_0001>

<llo_original>
// kernel: tpu_custom_call.1
$region0: #{tpu_custom_call.1}
  #allocation0 [shape = 'u32[]', space=smem, size = 0x4, offset = 0x4, fixed_abs, tag = 'smem constant byte address 0x4 - core index']
  #allocation1 [shape = 'u32[72,128]{1,0:T(1,128)}', space=vmem, size = 0x9000, scoped, tag = 'internal scratch']
  %s0 = inlined_call_operand.hbm [shape: f32[2,19,2,128], index: 0, kind: input, shape index: {}]
  %s1 = inlined_call_operand.hbm [shape: f32[2,34,2,128], index: 1, kind: output, shape index: {}]
  %s2 = sld [smem:[#allocation0]]
  $region41: #{tpu_custom_call.1} parent=0
    _
  %s4 = ssub.s32 1, %s2
  %s5 = scalar_select 0, %s4, %s2
  $region1: #{tpu_custom_call.1} parent=0
    #allocation2 [shape = 'u8[38912]{0}', space=vmem, size = 0x9800, scoped, tag = 'input window, operand 0']
    #allocation3 [shape = 's32[2]{0}', space=sflag, size = 0x8, scoped, tag = 'scoped memory for tpu_custom_call.1']
    #allocation4 [shape = 's32[2]{0}', space=sflag, size = 0x8, scoped, tag = 'scoped memory for tpu_custom_call.1']
    #allocation5 [shape = 'u8[69632]{0}', space=vmem, size = 0x11000, scoped, tag = 'output window, operand 0']
    %6 = vsyncpa [#allocation3], 0
    %s7 = scalar_lea.sflag [#allocation3], 1
    %8 = vsyncpa %s7, 0
    %9 = vsyncpa [#allocation4], 0
    %s10 = scalar_lea.sflag [#allocation4], 1
    %11 = vsyncpa %s10, 0
    loop: start=0, step=1, limit=4
    $region2: #{tpu_custom_call.1} parent=1 // loop_pre_header
      _
    $region3: #{tpu_custom_call.1} parent=1 // loop_header
      %s13 = sphi 0, %s17
      %p14 = scmp.ge.s32.totalorder %s13, 4
      %s20 = sphi 0, %s32
      %s21 = sphi 0, %s28
      %s22 = sphi 0, %s20
      %s23 = sphi 0, %s21
      %s24 = sphi 0, %s22
      %s25 = sphi 0, %s23
      %s37 = sphi 0, %s39
      %s40 = sphi 0, %s37
      %s41 = sphi 0, %s40
      %s57 = sphi 0, %s41
      %s65 = sphi 0, %s67
      %s68 = sphi 0, %s65
      %s69 = sphi 0, %s68
      %s85 = sphi 0, %s69
    $region4: #{tpu_custom_call.1} parent=1 // loop_header_branch
      %16 = sbr.rel (%p14) target = $region8
    $region5: #{tpu_custom_call.1} parent=1 // loop_body
      %s18 = ssub.s32 %s13, 1
      %s19 = ssub.s32 %s13, 2
      %s26 = sadd.s32 1, %s21
      %p27 = scmp.ge.s32.totalorder %s26, 1
      %s28 = scalar_select %p27, 0, %s26
      %s29 = sadd.s32 1, %s20
      %s30 = scalar_select %p27, %s29, %s20
      %p31 = scmp.ge.s32.totalorder %s30, 2
      %s32 = scalar_select %p31, 0, %s30
      %s33 = ssub.s32 %s20, %s32
      %s34 = ssub.s32 %s21, %s28
      %s35 = sor.u32 %s33, %s34
      %p36 = scmp.eq.s32.totalorder %s35, 0
      %s38 = sadd.s32 %s37, 1
      %s39 = scalar_select %p36, %s37, %s38
      %p42 = pneg %p36
      %p43 = scmp.eq.s32.totalorder %s13, 1
      %p44 = por %p42, %p43
      %p45 = scmp.ne.s32.totalorder %s37, %s40
      %p46 = scmp.eq.s32.totalorder %s13, 0
      %p47 = por %p45, %p46
      %p48 = scmp.ne.s32.totalorder %s37, %s40
      %p49 = scmp.eq.s32.totalorder %s18, 1
      %p50 = por %p48, %p49
      %p51 = scmp.ne.s32.totalorder %s40, %s41
      %p52 = scmp.eq.s32.totalorder %s18, 0
      %p53 = por %p51, %p52
      %p54 = scmp.ne.s32.totalorder %s40, %s41
      %p55 = scmp.eq.s32.totalorder %s19, 1
      %p56 = por %p54, %p55
      %p58 = scmp.ne.s32.totalorder %s41, %s57
      %p59 = scmp.eq.s32.totalorder %s19, 0
      %p60 = por %p58, %p59
      %s61 = ssub.s32 %s20, %s32
      %s62 = ssub.s32 %s21, %s28
      %s63 = sor.u32 %s61, %s62
      %p64 = scmp.eq.s32.totalorder %s63, 0
      %s66 = sadd.s32 %s65, 1
      %s67 = scalar_select %p64, %s65, %s66
      %p70 = pneg %p64
      %p71 = scmp.eq.s32.totalorder %s13, 1
      %p72 = por %p70, %p71
      %p73 = scmp.ne.s32.totalorder %s65, %s68
      %p74 = scmp.eq.s32.totalorder %s13, 0
      %p75 = por %p73, %p74
      %p76 = scmp.ne.s32.totalorder %s65, %s68
      %p77 = scmp.eq.s32.totalorder %s18, 1
      %p78 = por %p76, %p77
      %p79 = scmp.ne.s32.totalorder %s68, %s69
      %p80 = scmp.eq.s32.totalorder %s18, 0
      %p81 = por %p79, %p80
      %p82 = scmp.ne.s32.totalorder %s68, %s69
      %p83 = scmp.eq.s32.totalorder %s19, 1
      %p84 = por %p82, %p83
      %p86 = scmp.ne.s32.totalorder %s69, %s85
      %p87 = scmp.eq.s32.totalorder %s19, 0
      %p88 = por %p86, %p87
      %p89 = scmp.le.s32.totalorder 1, %s13
      %p90 = scmp.lt.s32.totalorder %s13, 3
      %p91 = pnand %p89, %p90
      %p92 = pneg %p91
      // Predicated region
      $region9: #{tpu_custom_call.1} parent=5 // pred_check
        _
      $region10: #{tpu_custom_call.1} parent=5 // pred_check_branch
        %94 = sbr.rel (%p91) target = $region12
      $region11: #{tpu_custom_call.1} parent=5 // pred_region
        %s95 = ssub.s32 %s13, 1
      $region12: #{tpu_custom_call.1} parent=5 // pred_fallthru
        _
      %p96 = scmp.lt.s32.totalorder %s13, 2
      // Predicated region
      $region13: #{tpu_custom_call.1} parent=5 // pred_check
        %p97 = pneg %p96
      $region14: #{tpu_custom_call.1} parent=5 // pred_check_branch
        %99 = sbr.rel (%p97) target = $region16
      $region15: #{tpu_custom_call.1} parent=5 // pred_region
        // Predicated region
        $region17: #{tpu_custom_call.1} parent=15 // pred_check
          %p100 = pneg %p47
        $region18: #{tpu_custom_call.1} parent=15 // pred_check_branch
          %102 = sbr.rel (%p100) target = $region20
        $region19: #{tpu_custom_call.1} parent=15 // pred_region
          %s103 = sand.u32 %s37, 1
          %s104 = scalar_lea.sflag [#allocation3], %s103
          %s105 = sand.u32 %s37, 1
          %s106 = smul.addr %s105, 38
          %s107 = scalar_lea.vmem [#allocation2], %s106
          %109 = vsyncadd %s104, 0
          %s110 = smul.addr %s20, 19
          %s111 = sadd.s32 %s21, %s110
          %s112 = smul.addr %s111, 2
          %s113 = scalar_lea.hbm %s0, %s112
          %s114 = sshll.u32 %s113, 4
          %s115 = int_to_ptr.hbm [resolvable:$true] %s114
          %s116 = sshll.u32 %s107, 4
          %s117 = int_to_ptr.vmem [resolvable:$true] %s116
          %122 = dma.hbm_to_vmem [thread:$0]  %s115, 608, %s117, %s104, 32, 32, 2
        $region20: #{tpu_custom_call.1} parent=15 // pred_fallthru
          _
      $region16: #{tpu_custom_call.1} parent=5 // pred_fallthru
        _
      %p123 = scmp.le.s32.totalorder 1, %s13
      %p124 = scmp.lt.s32.totalorder %s13, 3
      %p125 = pnand %p123, %p124
      %p126 = pneg %p125
      // Predicated region
      $region21: #{tpu_custom_call.1} parent=5 // pred_check
        _
      $region22: #{tpu_custom_call.1} parent=5 // pred_check_branch
        %128 = sbr.rel (%p125) target = $region24
      $region23: #{tpu_custom_call.1} parent=5 // pred_region
        %s129 = ssub.s32 %s13, 1
        %s130 = sand.u32 %s40, 1
        %s131 = scalar_lea.sflag [#allocation3], %s130
        %s132 = sand.u32 %s40, 1
        %s133 = smul.addr %s132, 38
        %s134 = scalar_lea.vmem [#allocation2], %s133
        // Predicated region
        $region25: #{tpu_custom_call.1} parent=23 // pred_check
          %p135 = pneg %p53
        $region26: #{tpu_custom_call.1} parent=23 // pred_check_branch
          %137 = sbr.rel (%p135) target = $region28
        $region27: #{tpu_custom_call.1} parent=23 // pred_region
          %139 = dma.done %s131, 608
        $region28: #{tpu_custom_call.1} parent=23 // pred_fallthru
          _
        %s140 = sand.u32 %s40, 1
        %s141 = scalar_lea.sflag [#allocation3], %s140
        %s142 = sand.u32 %s40, 1
        %s143 = smul.addr %s142, 38
        %s144 = scalar_lea.vmem [#allocation2], %s143
        %p145 = pneg %p53
        %p146 = pneg %p50
        %p147 = pneg %p81
        %p148 = pneg %p78
        %s149 = sand.u32 %s68, 1
        %s150 = scalar_lea.sflag [#allocation4], %s149
        %s151 = sand.u32 %s68, 1
        %s152 = smul.addr %s151, 68
        %s153 = scalar_lea.vmem [#allocation5], %s152
        %154 = vst [vmem:[%s153] sm:$0x3] -1000000.0
        %s155 = scalar_lea.vmem %s153, 2 [#allocation5]
        %156 = vst [vmem:[%s155] sm:$0x3] -1000000.0
        %s157 = scalar_lea.vmem %s153, 4 [#allocation5]
        %158 = vst [vmem:[%s157] sm:$0x3] -1000000.0
        %s159 = scalar_lea.vmem %s153, 6 [#allocation5]
        %160 = vst [vmem:[%s159] sm:$0x3] -1000000.0
        %s161 = scalar_lea.vmem %s153, 8 [#allocation5]
        %162 = vst [vmem:[%s161] sm:$0x3] -1000000.0
        %s163 = scalar_lea.vmem %s153, 10 [#allocation5]
        %164 = vst [vmem:[%s163] sm:$0x3] -1000000.0
        %s165 = scalar_lea.vmem %s153, 12 [#allocation5]
        %166 = vst [vmem:[%s165] sm:$0x3] -1000000.0
        %v167 = vld [vmem:[%s134] sm:$0x3]
        %s168 = scalar_lea.vmem %s153, 14 [#allocation5]
        %169 = vst [vmem:[%s168] sm:$0x3] %v167
        %s170 = scalar_lea.vmem %s134, 2 [#allocation2]
        %v171 = vld [vmem:[%s170] sm:$0x3]
        %s172 = scalar_lea.vmem %s153, 16 [#allocation5]
        %173 = vst [vmem:[%s172] sm:$0x3] %v171
        %s174 = scalar_lea.vmem %s153, 18 [#allocation5]
        %175 = vst [vmem:[%s174] sm:$0x3] -1000000.0
        %s176 = scalar_lea.vmem %s153, 20 [#allocation5]
        %177 = vst [vmem:[%s176] sm:$0x3] -1000000.0
        %s178 = scalar_lea.vmem %s134, 4 [#allocation2]
        %v179 = vld [vmem:[%s178] sm:$0x3]
        %s180 = scalar_lea.vmem %s153, 22 [#allocation5]
        %181 = vst [vmem:[%s180] sm:$0x3] %v179
        %s182 = scalar_lea.vmem %s134, 6 [#allocation2]
        %v183 = vld [vmem:[%s182] sm:$0x3]
        %s184 = scalar_lea.vmem %s153, 24 [#allocation5]
        %185 = vst [vmem:[%s184] sm:$0x3] %v183
        %s186 = scalar_lea.vmem %s134, 8 [#allocation2]
        %v187 = vld [vmem:[%s186] sm:$0x3]
        %s188 = scalar_lea.vmem %s153, 26 [#allocation5]
        %189 = vst [vmem:[%s188] sm:$0x3] %v187
        %s190 = scalar_lea.vmem %s153, 28 [#allocation5]
        %191 = vst [vmem:[%s190] sm:$0x3] -1000000.0
        %s192 = scalar_lea.vmem %s153, 30 [#allocation5]
        %193 = vst [vmem:[%s192] sm:$0x3] -1000000.0
        %s194 = scalar_lea.vmem %s153, 32 [#allocation5]
        %195 = vst [vmem:[%s194] sm:$0x3] -1000000.0
        %s196 = scalar_lea.vmem %s134, 10 [#allocation2]
        %v197 = vld [vmem:[%s196] sm:$0x3]
        %s198 = scalar_lea.vmem %s153, 34 [#allocation5]
        %199 = vst [vmem:[%s198] sm:$0x3] %v197
        %s200 = scalar_lea.vmem %s153, 36 [#allocation5]
        %201 = vst [vmem:[%s200] sm:$0x3] -1000000.0
        %s202 = scalar_lea.vmem %s134, 12 [#allocation2]
        %v203 = vld [vmem:[%s202] sm:$0x3]
        %s204 = scalar_lea.vmem %s153, 38 [#allocation5]
        %205 = vst [vmem:[%s204] sm:$0x3] %v203
        %s206 = scalar_lea.vmem %s134, 14 [#allocation2]
        %v207 = vld [vmem:[%s206] sm:$0x3]
        %s208 = scalar_lea.vmem %s153, 40 [#allocation5]
        %209 = vst [vmem:[%s208] sm:$0x3] %v207
        %s210 = scalar_lea.vmem %s134, 16 [#allocation2]
        %v211 = vld [vmem:[%s210] sm:$0x3]
        %s212 = scalar_lea.vmem %s153, 42 [#allocation5]
        %213 = vst [vmem:[%s212] sm:$0x3] %v211
        %s214 = scalar_lea.vmem %s134, 18 [#allocation2]
        %v215 = vld [vmem:[%s214] sm:$0x3]
        %s216 = scalar_lea.vmem %s153, 44 [#allocation5]
        %217 = vst [vmem:[%s216] sm:$0x3] %v215
        %s218 = scalar_lea.vmem %s134, 20 [#allocation2]
        %v219 = vld [vmem:[%s218] sm:$0x3]
        %s220 = scalar_lea.vmem %s153, 46 [#allocation5]
        %221 = vst [vmem:[%s220] sm:$0x3] %v219
        %s222 = scalar_lea.vmem %s134, 22 [#allocation2]
        %v223 = vld [vmem:[%s222] sm:$0x3]
        %s224 = scalar_lea.vmem %s153, 48 [#allocation5]
        %225 = vst [vmem:[%s224] sm:$0x3] %v223
        %s226 = scalar_lea.vmem %s134, 24 [#allocation2]
        %v227 = vld [vmem:[%s226] sm:$0x3]
        %s228 = scalar_lea.vmem %s153, 50 [#allocation5]
        %229 = vst [vmem:[%s228] sm:$0x3] %v227
        %s230 = scalar_lea.vmem %s134, 26 [#allocation2]
        %v231 = vld [vmem:[%s230] sm:$0x3]
        %s232 = scalar_lea.vmem %s153, 52 [#allocation5]
        %233 = vst [vmem:[%s232] sm:$0x3] %v231
        %s234 = scalar_lea.vmem %s134, 28 [#allocation2]
        %v235 = vld [vmem:[%s234] sm:$0x3]
        %s236 = scalar_lea.vmem %s153, 54 [#allocation5]
        %237 = vst [vmem:[%s236] sm:$0x3] %v235
        %s238 = scalar_lea.vmem %s134, 30 [#allocation2]
        %v239 = vld [vmem:[%s238] sm:$0x3]
        %s240 = scalar_lea.vmem %s153, 56 [#allocation5]
        %241 = vst [vmem:[%s240] sm:$0x3] %v239
        %s242 = scalar_lea.vmem %s153, 58 [#allocation5]
        %243 = vst [vmem:[%s242] sm:$0x3] -1000000.0
        %s244 = scalar_lea.vmem %s153, 60 [#allocation5]
        %245 = vst [vmem:[%s244] sm:$0x3] -1000000.0
        %s246 = scalar_lea.vmem %s134, 32 [#allocation2]
        %v247 = vld [vmem:[%s246] sm:$0x3]
        %s248 = scalar_lea.vmem %s153, 62 [#allocation5]
        %249 = vst [vmem:[%s248] sm:$0x3] %v247
        %s250 = scalar_lea.vmem %s134, 34 [#allocation2]
        %v251 = vld [vmem:[%s250] sm:$0x3]
        %s252 = scalar_lea.vmem %s153, 64 [#allocation5]
        %253 = vst [vmem:[%s252] sm:$0x3] %v251
        %s254 = scalar_lea.vmem %s134, 36 [#allocation2]
        %v255 = vld [vmem:[%s254] sm:$0x3]
        %s256 = scalar_lea.vmem %s153, 66 [#allocation5]
        %257 = vst [vmem:[%s256] sm:$0x3] %v255
        %s258 = sand.u32 %s68, 1
        %s259 = scalar_lea.sflag [#allocation4], %s258
        %s260 = sand.u32 %s68, 1
        %s261 = smul.addr %s260, 68
        %s262 = scalar_lea.vmem [#allocation5], %s261
        // Predicated region
        $region29: #{tpu_custom_call.1} parent=23 // pred_check
          %p263 = pneg %p78
        $region30: #{tpu_custom_call.1} parent=23 // pred_check_branch
          %265 = sbr.rel (%p263) target = $region32
        $region31: #{tpu_custom_call.1} parent=23 // pred_region
          %267 = vsyncadd %s259, 0
          %s268 = smul.addr %s22, 34
          %s269 = sadd.s32 %s23, %s268
          %s270 = smul.addr %s269, 2
          %s271 = scalar_lea.hbm %s1, %s270
          %s272 = sshll.u32 %s262, 4
          %s273 = int_to_ptr.vmem [resolvable:$true] %s272
          %s274 = sshll.u32 %s271, 4
          %s275 = int_to_ptr.hbm [resolvable:$true] %s274
          %280 = dma.vmem_to_hbm [thread:$0]  %s273, 1088, %s275, %s259, 32, 32, 2
        $region32: #{tpu_custom_call.1} parent=23 // pred_fallthru
          _
      $region24: #{tpu_custom_call.1} parent=5 // pred_fallthru
        _
      %p281 = scmp.le.s32.totalorder 2, %s13
      // Predicated region
      $region33: #{tpu_custom_call.1} parent=5 // pred_check
        %p282 = pneg %p281
      $region34: #{tpu_custom_call.1} parent=5 // pred_check_branch
        %284 = sbr.rel (%p282) target = $region36
      $region35: #{tpu_custom_call.1} parent=5 // pred_region
        %s285 = ssub.s32 %s13, 2
        // Predicated region
        $region37: #{tpu_custom_call.1} parent=35 // pred_check
          %p286 = pneg %p84
        $region38: #{tpu_custom_call.1} parent=35 // pred_check_branch
          %288 = sbr.rel (%p286) target = $region40
        $region39: #{tpu_custom_call.1} parent=35 // pred_region
          %s289 = sand.u32 %s69, 1
          %s290 = scalar_lea.sflag [#allocation4], %s289
          %s291 = sand.u32 %s69, 1
          %s292 = smul.addr %s291, 68
          %s293 = scalar_lea.vmem [#allocation5], %s292
          %295 = dma.done %s290, 1088
        $region40: #{tpu_custom_call.1} parent=35 // pred_fallthru
          _
      $region36: #{tpu_custom_call.1} parent=5 // pred_fallthru
        _
    $region6: #{tpu_custom_call.1} parent=1 // loop_footer
      %s17 = sadd.s32 1, %s13
    $region7: #{tpu_custom_call.1} parent=1 // loop_footer_branch
      %12 = sbr.rel target = $region3
    $region8: #{tpu_custom_call.1} parent=1 // loop_exit
      _
    %296 = vsyncpa [#allocation3], 1
    %s297 = scalar_lea.sflag [#allocation3], 1
    %298 = vsyncpa %s297, 1
    %299 = vsyncpa [#allocation4], 1
    %s300 = scalar_lea.sflag [#allocation4], 1
    %301 = vsyncpa %s300, 1

</llo_original>
